<compile_context>
chip_gen: v6e
topology: v6e:2x2x1
jax: 0.10.0
libtpu: 0.0.40
codegen_flags: <defaults>
</compile_context>

<pallas_src>
import jax
import jax.numpy as jnp
from jax.experimental import pallas as pl
from jax.experimental.pallas import tpu as pltpu


def _second_diff_loss_jnp(predictions, smoothing_weight):
    """Plain-JAX fallback (small inputs / extreme seq_len). Same math as the module."""
    x = predictions.astype(jnp.float32)
    sd = x[:, 2:] - 2.0 * x[:, 1:-1] + x[:, :-2]
    return jnp.mean(sd * sd) * jnp.float32(smoothing_weight)


def _smoothing_partial_kernel(x_ref, o_ref):
    """One grid step: fused 2nd temporal difference, square, per-lane partial sum.

    Every block is a full (block_rows, S) tile (remainder rows are handled in the
    wrapper), so no row masking is needed here.
    """
    x = x_ref[...].astype(jnp.float32)                    # (block_rows, S)
    # Fused second-order temporal difference (single pass over the tile).
    # TODO(synk): replace the lane-misaligned slices with pltpu.roll shifts (XLU
    # slot is idle here) once the roll direction is validated on hardware.
    sd = x[:, 2:] - 2.0 * x[:, 1:-1] + x[:, :-2]          # (block_rows, S - 2)
    # Reduce only over the sublane (row) axis -> lane-dense per-block partial;
    # the wrapper performs the one final cross-lane sum.
    o_ref[0] = jnp.sum(sd * sd, axis=0, keepdims=True)    # (1, S - 2)


def temporal_smoothing_loss(predictions, smoothing_weight=0.1):
    """JAX/Pallas equivalent of TemporalSmoothingLoss.forward.

    predictions: [batch_size, seq_len] array.
    Returns float32 scalar mean(second_diff**2) * smoothing_weight, or 0.0 if seq_len < 3.
    """
    B, S = predictions.shape
    if S < 3:  # static shape check, same semantics as the torch module
        return jnp.float32(0.0)

    count = B * (S - 2)
    itemsize = predictions.dtype.itemsize
    bytes_per_row = S * itemsize

    # Tiny inputs: the custom-call boundary is pure overhead; let XLA fuse it.
    if B * S < 65536:
        return _second_diff_loss_jnp(predictions, smoothing_weight)

    # Extremely long sequences: even an 8-row block would blow the VMEM budget.
    # TODO(synk): S-axis tiling with a 2-column halo for this regime.
    if 8 * bytes_per_row > (2 << 20):
        return _second_diff_loss_jnp(predictions, smoothing_weight)

    # --- Block sizing ----------------------------------------------------------
    # Ceiling ~1 MiB per input block (x2 double buffers stays well under the v5e
    # scoped-VMEM default), floor ~256 KiB so the per-step overhead is amortized,
    # and within that range prefer an even count of >= 8 equal blocks so the DMA
    # pipeline has a steady state and v7x megacore splits the stream evenly.
    max_rows = max(8, ((1 << 20) // bytes_per_row) // 8 * 8)
    min_rows = max(8, ((256 << 10) // bytes_per_row) // 8 * 8)
    n_blocks = max(8, pl.cdiv(B * bytes_per_row, 1 << 20))
    n_blocks += n_blocks % 2                       # even block count for 2 TCs
    tb = (B // n_blocks) // 8 * 8                  # sublane-aligned block rows
    tb = min(max(tb, min_rows), max_rows)
    grid = B // tb
    if grid == 0:                                  # B smaller than one viable block
        return _second_diff_loss_jnp(predictions, smoothing_weight)
    b_main = grid * tb                             # rows covered by the Pallas grid

    partials = pl.pallas_call(
        _smoothing_partial_kernel,
        out_shape=jax.ShapeDtypeStruct((grid, 1, S - 2), jnp.float32),
        grid_spec=pltpu.PrefetchScalarGridSpec(
            num_scalar_prefetch=0,
            grid=(grid,),
            in_specs=[pl.BlockSpec((tb, S), lambda i: (i, 0))],
            out_specs=pl.BlockSpec((1, 1, S - 2), lambda i: (i, 0, 0)),
        ),
        compiler_params=pltpu.CompilerParams(
            dimension_semantics=("parallel",),     # megacore split on v7x
            vmem_limit_bytes=32 << 20,             # headroom beyond v5e's 16 MiB default
        ),
        cost_estimate=pl.CostEstimate(
            flops=5 * b_main * (S - 2),
            transcendentals=0,
            bytes_accessed=b_main * S * itemsize + grid * (S - 2) * 4,
        ),
    )(predictions)

    total = jnp.sum(partials)

    # Remainder rows (< tb) that do not fill a whole block: fold them in with
    # plain jnp instead of masking inside the kernel.  This slice is tiny.
    if b_main < B:
        tail = predictions[b_main:].astype(jnp.float32)
        sd_t = tail[:, 2:] - 2.0 * tail[:, 1:-1] + tail[:, :-2]
        total = total + jnp.sum(sd_t * sd_t)

    return total * jnp.float32(smoothing_weight / count)


if __name__ == "__main__":
    key = jax.random.PRNGKey(0)
    k1, k2 = jax.random.split(key)

    def ref_loss(x, w):
        x = x.astype(jnp.float32)
        first = x[:, 1:] - x[:, :-1]
        second = first[:, 1:] - first[:, :-1]
        return jnp.mean(second ** 2) * w

    # Small shape consistent with the module (batch=2, seq=8) -> fused jnp path.
    small = jax.random.normal(k1, (2, 8), dtype=jnp.float32)
    loss_small = jax.block_until_ready(temporal_smoothing_loss(small, 0.1))
    ref_small = ref_loss(small, 0.1)
    assert jnp.allclose(loss_small, ref_small, rtol=1e-5, atol=1e-6), (loss_small, ref_small)

    # Larger shape exercising the tiled Pallas path:
    #   6 equal 168-row blocks (balanced across v7x cores) + 21 jnp tail rows.
    big = jax.random.normal(k2, (1029, 384), dtype=jnp.float32)
    loss_big = jax.block_until_ready(temporal_smoothing_loss(big, 0.1))
    ref_big = ref_loss(big, 0.1)
    assert jnp.allclose(loss_big, ref_big, rtol=1e-4, atol=1e-6), (loss_big, ref_big)

    # seq_len < 3 path returns exactly 0.0 (same semantics as the torch module).
    assert float(temporal_smoothing_loss(small[:, :2], 0.1)) == 0.0

    print("KERNEL_OK")
</pallas_src>

<mosaic_0001>
module attributes {stable_mosaic.version = 11 : i64} {
  func.func @_smoothing_partial_kernel(%arg0: i32, %arg1: memref<168x384xf32, #tpu.memory_space<vmem>>, %arg2: memref<1x1x382xf32, #tpu.memory_space<vmem>>) attributes {dimension_semantics = [#tpu.dimension_semantics<parallel>], iteration_bounds = array<i64: 6>, scalar_prefetch = 0 : i64, scratch_operands = 0 : i64, tpu.core_type = #tpu.core_type<tc>, window_params = [{transform_indices = @transform_0, window_bounds = array<i64: 168, 384>}, {transform_indices = @transform_1, window_bounds = array<i64: 1, 1, 382>}]} {
    %c0 = arith.constant 0 : index
    %c0_0 = arith.constant 0 : index
    %0 = vector.load %arg1[%c0, %c0_0] : memref<168x384xf32, #tpu.memory_space<vmem>>, vector<168x384xf32>
    %1 = vector.extract_strided_slice %0 {offsets = [0, 2], sizes = [168, 382], strides = [1, 1]} : vector<168x384xf32> to vector<168x382xf32>
    %2 = vector.extract_strided_slice %0 {offsets = [0, 1], sizes = [168, 382], strides = [1, 1]} : vector<168x384xf32> to vector<168x382xf32>
    %cst = arith.constant 2.000000e+00 : f32
    %3 = vector.broadcast %cst : f32 to vector<168x382xf32>
    %4 = arith.mulf %3, %2 : vector<168x382xf32>
    %5 = arith.subf %1, %4 : vector<168x382xf32>
    %6 = vector.extract_strided_slice %0 {offsets = [0, 0], sizes = [168, 382], strides = [1, 1]} : vector<168x384xf32> to vector<168x382xf32>
    %7 = arith.addf %5, %6 : vector<168x382xf32>
    %8 = arith.mulf %7, %7 : vector<168x382xf32>
    %cst_1 = arith.constant dense<0.000000e+00> : vector<382xf32>
    %9 = vector.multi_reduction <add>, %8, %cst_1 [0] : vector<168x382xf32> to vector<382xf32>
    %10 = vector.shape_cast %9 : vector<382xf32> to vector<1x382xf32>
    %c0_2 = arith.constant 0 : index
    %c0_3 = arith.constant 0 : index
    %c0_4 = arith.constant 0 : index
    %11 = vector.load %arg2[%c0_2, %c0_3, %c0_4] : memref<1x1x382xf32, #tpu.memory_space<vmem>>, vector<1x1x382xf32>
    %12 = vector.shape_cast %11 : vector<1x1x382xf32> to vector<1x382xf32>
    %13 = vector.shape_cast %10 : vector<1x382xf32> to vector<1x1x382xf32>
    tpu.vector_store %arg2[%c0_2, %c0_3, %c0_4], %13 {strides = array<i32>} : memref<1x1x382xf32, #tpu.memory_space<vmem>>, vector<1x1x382xf32>,
    return
  }
  func.func @transform_0(%arg0: i32) -> (i32, i32) {
    %c0_i32 = arith.constant 0 : i32
    %c0_i32_0 = arith.constant 0 : i32
    return %arg0, %c0_i32 : i32, i32
  }
  func.func @transform_1(%arg0: i32) -> (i32, i32, i32) {
    %c0_i32 = arith.constant 0 : i32
    %c0_i32_0 = arith.constant 0 : i32
    %c0_i32_1 = arith.constant 0 : i32
    return %arg0, %c0_i32, %c0_i32_0 : i32, i32, i32
  }
}

</mosaic_0001>

<llo_original>
// kernel: tpu_custom_call.1
$region0: #{tpu_custom_call.1}
  #allocation0 [shape = 'u32[]', space=smem, size = 0x4, offset = 0x4, fixed_abs, tag = 'smem constant byte address 0x4 - core index']
  #allocation1 [shape = 'u32[144,128]{1,0:T(1,128)}', space=vmem, size = 0x12000, scoped, tag = 'internal scratch']
  %s0 = inlined_call_operand.hbm [shape: f32[1029,384], index: 0, kind: input, shape index: {}]
  %s1 = inlined_call_operand.hbm [shape: f32[6,1,382], index: 1, kind: output, shape index: {}]
  %s2 = sld [smem:[#allocation0]]
  $region41: #{tpu_custom_call.1} parent=0
    _
  %s4 = ssub.s32 1, %s2
  %s5 = scalar_select 0, %s4, %s2
  $region1: #{tpu_custom_call.1} parent=0
    #allocation2 [shape = 'u8[516096]{0}', space=vmem, size = 0x7e000, scoped, tag = 'input window, operand 0']
    #allocation3 [shape = 's32[2]{0}', space=sflag, size = 0x8, scoped, tag = 'scoped memory for tpu_custom_call.1']
    #allocation4 [shape = 's32[2]{0}', space=sflag, size = 0x8, scoped, tag = 'scoped memory for tpu_custom_call.1']
    #allocation5 [shape = 'u8[3072]{0}', space=vmem, size = 0xc00, scoped, tag = 'output window, operand 0']
    %6 = vsyncpa [#allocation3], 0
    %s7 = scalar_lea.sflag [#allocation3], 1
    %8 = vsyncpa %s7, 0
    %9 = vsyncpa [#allocation4], 0
    %s10 = scalar_lea.sflag [#allocation4], 1
    %11 = vsyncpa %s10, 0
    loop: start=0, step=1, limit=8
    $region2: #{tpu_custom_call.1} parent=1 // loop_pre_header
      _
    $region3: #{tpu_custom_call.1} parent=1 // loop_header
      %s13 = sphi 0, %s17
      %p14 = scmp.ge.s32.totalorder %s13, 8
      %s23 = sphi 0, %s25
      %s26 = sphi 0, %s23
      %s27 = sphi 0, %s26
      %s43 = sphi 0, %s27
      %s49 = sphi 0, %s51
      %s52 = sphi 0, %s49
      %s53 = sphi 0, %s52
      %s69 = sphi 0, %s53
    $region4: #{tpu_custom_call.1} parent=1 // loop_header_branch
      %16 = sbr.rel (%p14) target = $region8
    $region5: #{tpu_custom_call.1} parent=1 // loop_body
      %s18 = ssub.s32 %s13, 1
      %s19 = ssub.s32 %s13, 2
      %s20 = sadd.s32 %s13, 1
      %s21 = ssub.s32 %s13, %s20
      %p22 = scmp.eq.s32.totalorder %s21, 0
      %s24 = sadd.s32 %s23, 1
      %s25 = scalar_select %p22, %s23, %s24
      %p28 = pneg %p22
      %p29 = scmp.eq.s32.totalorder %s13, 5
      %p30 = por %p28, %p29
      %p31 = scmp.ne.s32.totalorder %s23, %s26
      %p32 = scmp.eq.s32.totalorder %s13, 0
      %p33 = por %p31, %p32
      %p34 = scmp.ne.s32.totalorder %s23, %s26
      %p35 = scmp.eq.s32.totalorder %s18, 5
      %p36 = por %p34, %p35
      %p37 = scmp.ne.s32.totalorder %s26, %s27
      %p38 = scmp.eq.s32.totalorder %s18, 0
      %p39 = por %p37, %p38
      %p40 = scmp.ne.s32.totalorder %s26, %s27
      %p41 = scmp.eq.s32.totalorder %s19, 5
      %p42 = por %p40, %p41
      %p44 = scmp.ne.s32.totalorder %s27, %s43
      %p45 = scmp.eq.s32.totalorder %s19, 0
      %p46 = por %p44, %p45
      %s47 = ssub.s32 %s13, %s20
      %p48 = scmp.eq.s32.totalorder %s47, 0
      %s50 = sadd.s32 %s49, 1
      %s51 = scalar_select %p48, %s49, %s50
      %p54 = pneg %p48
      %p55 = scmp.eq.s32.totalorder %s13, 5
      %p56 = por %p54, %p55
      %p57 = scmp.ne.s32.totalorder %s49, %s52
      %p58 = scmp.eq.s32.totalorder %s13, 0
      %p59 = por %p57, %p58
      %p60 = scmp.ne.s32.totalorder %s49, %s52
      %p61 = scmp.eq.s32.totalorder %s18, 5
      %p62 = por %p60, %p61
      %p63 = scmp.ne.s32.totalorder %s52, %s53
      %p64 = scmp.eq.s32.totalorder %s18, 0
      %p65 = por %p63, %p64
      %p66 = scmp.ne.s32.totalorder %s52, %s53
      %p67 = scmp.eq.s32.totalorder %s19, 5
      %p68 = por %p66, %p67
      %p70 = scmp.ne.s32.totalorder %s53, %s69
      %p71 = scmp.eq.s32.totalorder %s19, 0
      %p72 = por %p70, %p71
      %p73 = scmp.le.s32.totalorder 1, %s13
      %p74 = scmp.lt.s32.totalorder %s13, 7
      %p75 = pnand %p73, %p74
      %p76 = pneg %p75
      // Predicated region
      $region9: #{tpu_custom_call.1} parent=5 // pred_check
        _
      $region10: #{tpu_custom_call.1} parent=5 // pred_check_branch
        %78 = sbr.rel (%p75) target = $region12
      $region11: #{tpu_custom_call.1} parent=5 // pred_region
        %s79 = ssub.s32 %s13, 1
      $region12: #{tpu_custom_call.1} parent=5 // pred_fallthru
        _
      %p80 = scmp.lt.s32.totalorder %s13, 6
      // Predicated region
      $region13: #{tpu_custom_call.1} parent=5 // pred_check
        %p81 = pneg %p80
      $region14: #{tpu_custom_call.1} parent=5 // pred_check_branch
        %83 = sbr.rel (%p81) target = $region16
      $region15: #{tpu_custom_call.1} parent=5 // pred_region
        // Predicated region
        $region17: #{tpu_custom_call.1} parent=15 // pred_check
          %p84 = pneg %p33
        $region18: #{tpu_custom_call.1} parent=15 // pred_check_branch
          %86 = sbr.rel (%p84) target = $region20
        $region19: #{tpu_custom_call.1} parent=15 // pred_region
          %s87 = sand.u32 %s23, 1
          %s88 = scalar_lea.sflag [#allocation3], %s87
          %s89 = sand.u32 %s23, 1
          %s90 = smul.addr %s89, 504
          %s91 = scalar_lea.vmem [#allocation2], %s90
          %s92 = smul.u32 21, %s13
          %s93 = ssub.s32 129, %s92
          %p94 = scmp.lt.s32.totalorder %s93, 21
          %s95 = scalar_select %p94, %s93, 21
          %s96 = smul.u32 128, %s95
          %s97 = smul.u32 %s96, 3
          %s99 = ssub.s32 8064, %s97
          %100 = vsyncadd %s88, %s99
          %p101 = scmp.ne.s32.totalorder 0, %s97
          %s102 = smul.addr %s92, 3
          %s103 = smul.addr %s102, 128
          %s104 = scalar_lea.hbm %s0, %s103
          %s105 = smul.u32 24, %s95
          %s106 = sshll.u32 %s91, 4
          %s107 = int_to_ptr.vmem [resolvable:$true] %s106
          %s108 = sshll.u32 %s105, 4
          %112 = dma.hbm_to_vmem [thread:$0]  (%p101), %s104, %s108, %s107, %s88, 384, 384, 24
        $region20: #{tpu_custom_call.1} parent=15 // pred_fallthru
          _
      $region16: #{tpu_custom_call.1} parent=5 // pred_fallthru
        _
      %p113 = scmp.le.s32.totalorder 1, %s13
      %p114 = scmp.lt.s32.totalorder %s13, 7
      %p115 = pnand %p113, %p114
      %p116 = pneg %p115
      // Predicated region
      $region21: #{tpu_custom_call.1} parent=5 // pred_check
        _
      $region22: #{tpu_custom_call.1} parent=5 // pred_check_branch
        %118 = sbr.rel (%p115) target = $region24
      $region23: #{tpu_custom_call.1} parent=5 // pred_region
        %s119 = ssub.s32 %s13, 1
        %s120 = sand.u32 %s26, 1
        %s121 = scalar_lea.sflag [#allocation3], %s120
        %s122 = sand.u32 %s26, 1
        %s123 = smul.addr %s122, 504
        %s124 = scalar_lea.vmem [#allocation2], %s123
        // Predicated region
        $region25: #{tpu_custom_call.1} parent=23 // pred_check
          %p125 = pneg %p39
        $region26: #{tpu_custom_call.1} parent=23 // pred_check_branch
          %127 = sbr.rel (%p125) target = $region28
        $region27: #{tpu_custom_call.1} parent=23 // pred_region
          %128 = dma.done %s121, 8064
        $region28: #{tpu_custom_call.1} parent=23 // pred_fallthru
          _
        %s129 = sand.u32 %s26, 1
        %s130 = scalar_lea.sflag [#allocation3], %s129
        %s131 = sand.u32 %s26, 1
        %s132 = smul.addr %s131, 504
        %s133 = scalar_lea.vmem [#allocation2], %s132
        %p134 = pneg %p39
        %p135 = pneg %p36
        %p136 = pneg %p65
        %p137 = pneg %p62
        %s138 = sand.u32 %s52, 1
        %s139 = scalar_lea.sflag [#allocation4], %s138
        %s140 = sand.u32 %s52, 1
        %s141 = smul.addr %s140, 3
        %s142 = scalar_lea.vmem [#allocation5], %s141
        %s143 = smul.u32 21, %s18
        %s144 = ssub.s32 129, %s143
        %p145 = scmp.lt.s32.totalorder %s144, 21
        %s146 = scalar_select %p145, %s144, 21
        %s147 = smul.u32 128, %s146
        %s148 = smul.u32 %s147, 3
        %v149 = vld [vmem:[%s124] sm:$0xff]
        %v150 = vld [vmem:[%s124 + $0x8] sm:$0xff]
        %v151 = vld [vmem:[%s124 + $0x10] sm:$0xff]
        %v152 = vld [vmem:[%s124 + $0x18] sm:$0xff]
        %v153 = vld [vmem:[%s124 + $0x20] sm:$0xff]
        %v154 = vld [vmem:[%s124 + $0x28] sm:$0xff]
        %v155 = vld [vmem:[%s124 + $0x30] sm:$0xff]
        %v156 = vld [vmem:[%s124 + $0x38] sm:$0xff]
        %v157 = vld [vmem:[%s124 + $0x40] sm:$0xff]
        %v158 = vld [vmem:[%s124 + $0x48] sm:$0xff]
        %v159 = vld [vmem:[%s124 + $0x50] sm:$0xff]
        %v160 = vld [vmem:[%s124 + $0x58] sm:$0xff]
        %v161 = vld [vmem:[%s124 + $0x60] sm:$0xff]
        %v162 = vld [vmem:[%s124 + $0x68] sm:$0xff]
        %v163 = vld [vmem:[%s124 + $0x70] sm:$0xff]
        %v164 = vld [vmem:[%s124 + $0x78] sm:$0xff]
        %v165 = vld [vmem:[%s124 + $0x80] sm:$0xff]
        %v166 = vld [vmem:[%s124 + $0x88] sm:$0xff]
        %v167 = vld [vmem:[%s124 + $0x90] sm:$0xff]
        %v168 = vld [vmem:[%s124 + $0x98] sm:$0xff]
        %v169 = vld [vmem:[%s124 + $0xa0] sm:$0xff]
        %v170 = vld [vmem:[%s124 + $0xa8] sm:$0xff]
        %v171 = vld [vmem:[%s124 + $0xb0] sm:$0xff]
        %v172 = vld [vmem:[%s124 + $0xb8] sm:$0xff]
        %v173 = vld [vmem:[%s124 + $0xc0] sm:$0xff]
        %v174 = vld [vmem:[%s124 + $0xc8] sm:$0xff]
        %v175 = vld [vmem:[%s124 + $0xd0] sm:$0xff]
        %v176 = vld [vmem:[%s124 + $0xd8] sm:$0xff]
        %v177 = vld [vmem:[%s124 + $0xe0] sm:$0xff]
        %v178 = vld [vmem:[%s124 + $0xe8] sm:$0xff]
        %v179 = vld [vmem:[%s124 + $0xf0] sm:$0xff]
        %v180 = vld [vmem:[%s124 + $0xf8] sm:$0xff]
        %v181 = vld [vmem:[%s124 + $0x100] sm:$0xff]
        %v182 = vld [vmem:[%s124 + $0x108] sm:$0xff]
        %v183 = vld [vmem:[%s124 + $0x110] sm:$0xff]
        %v184 = vld [vmem:[%s124 + $0x118] sm:$0xff]
        %v185 = vld [vmem:[%s124 + $0x120] sm:$0xff]
        %v186 = vld [vmem:[%s124 + $0x128] sm:$0xff]
        %v187 = vld [vmem:[%s124 + $0x130] sm:$0xff]
        %v188 = vld [vmem:[%s124 + $0x138] sm:$0xff]
        %v189 = vld [vmem:[%s124 + $0x140] sm:$0xff]
        %v190 = vld [vmem:[%s124 + $0x148] sm:$0xff]
        %v191 = vld [vmem:[%s124 + $0x150] sm:$0xff]
        %v192 = vld [vmem:[%s124 + $0x158] sm:$0xff]
        %v193 = vld [vmem:[%s124 + $0x160] sm:$0xff]
        %v194 = vld [vmem:[%s124 + $0x168] sm:$0xff]
        %v195 = vld [vmem:[%s124 + $0x170] sm:$0xff]
        %v196 = vld [vmem:[%s124 + $0x178] sm:$0xff]
        %v197 = vld [vmem:[%s124 + $0x180] sm:$0xff]
        %v198 = vld [vmem:[%s124 + $0x188] sm:$0xff]
        %v199 = vld [vmem:[%s124 + $0x190] sm:$0xff]
        %v200 = vld [vmem:[%s124 + $0x198] sm:$0xff]
        %v201 = vld [vmem:[%s124 + $0x1a0] sm:$0xff]
        %v202 = vld [vmem:[%s124 + $0x1a8] sm:$0xff]
        %v203 = vld [vmem:[%s124 + $0x1b0] sm:$0xff]
        %v204 = vld [vmem:[%s124 + $0x1b8] sm:$0xff]
        %v205 = vld [vmem:[%s124 + $0x1c0] sm:$0xff]
        %v206 = vld [vmem:[%s124 + $0x1c8] sm:$0xff]
        %v207 = vld [vmem:[%s124 + $0x1d0] sm:$0xff]
        %v208 = vld [vmem:[%s124 + $0x1d8] sm:$0xff]
        %v209 = vld [vmem:[%s124 + $0x1e0] sm:$0xff]
        %v210 = vld [vmem:[%s124 + $0x1e8] sm:$0xff]
        %v211 = vld [vmem:[%s124 + $0x1f0] sm:$0xff]
        %v212 = vmul.f32 %v149, 2.0
        %v213 = vmul.f32 %v150, 2.0
        %v214 = vmul.f32 %v151, 2.0
        %v215 = vmul.f32 %v152, 2.0
        %v216 = vmul.f32 %v153, 2.0
        %v217 = vmul.f32 %v154, 2.0
        %v218 = vmul.f32 %v155, 2.0
        %v219 = vmul.f32 %v156, 2.0
        %v220 = vmul.f32 %v157, 2.0
        %v221 = vmul.f32 %v158, 2.0
        %v222 = vmul.f32 %v159, 2.0
        %v223 = vmul.f32 %v160, 2.0
        %v224 = vmul.f32 %v161, 2.0
        %v225 = vmul.f32 %v162, 2.0
        %v226 = vmul.f32 %v163, 2.0
        %v227 = vmul.f32 %v164, 2.0
        %v228 = vmul.f32 %v165, 2.0
        %v229 = vmul.f32 %v166, 2.0
        %v230 = vmul.f32 %v167, 2.0
        %v231 = vmul.f32 %v168, 2.0
        %v232 = vmul.f32 %v169, 2.0
        %v233 = vmul.f32 %v170, 2.0
        %v234 = vmul.f32 %v171, 2.0
        %v235 = vmul.f32 %v172, 2.0
        %v236 = vmul.f32 %v173, 2.0
        %v237 = vmul.f32 %v174, 2.0
        %v238 = vmul.f32 %v175, 2.0
        %v239 = vmul.f32 %v176, 2.0
        %v240 = vmul.f32 %v177, 2.0
        %v241 = vmul.f32 %v178, 2.0
        %v242 = vmul.f32 %v179, 2.0
        %v243 = vmul.f32 %v180, 2.0
        %v244 = vmul.f32 %v181, 2.0
        %v245 = vmul.f32 %v182, 2.0
        %v246 = vmul.f32 %v183, 2.0
        %v247 = vmul.f32 %v184, 2.0
        %v248 = vmul.f32 %v185, 2.0
        %v249 = vmul.f32 %v186, 2.0
        %v250 = vmul.f32 %v187, 2.0
        %v251 = vmul.f32 %v188, 2.0
        %v252 = vmul.f32 %v189, 2.0
        %v253 = vmul.f32 %v190, 2.0
        %v254 = vmul.f32 %v191, 2.0
        %v255 = vmul.f32 %v192, 2.0
        %v256 = vmul.f32 %v193, 2.0
        %v257 = vmul.f32 %v194, 2.0
        %v258 = vmul.f32 %v195, 2.0
        %v259 = vmul.f32 %v196, 2.0
        %v260 = vmul.f32 %v197, 2.0
        %v261 = vmul.f32 %v198, 2.0
        %v262 = vmul.f32 %v199, 2.0
        %v263 = vmul.f32 %v200, 2.0
        %v264 = vmul.f32 %v201, 2.0
        %v265 = vmul.f32 %v202, 2.0
        %v266 = vmul.f32 %v203, 2.0
        %v267 = vmul.f32 %v204, 2.0
        %v268 = vmul.f32 %v205, 2.0
        %v269 = vmul.f32 %v206, 2.0
        %v270 = vmul.f32 %v207, 2.0
        %v271 = vmul.f32 %v208, 2.0
        %v272 = vmul.f32 %v209, 2.0
        %v273 = vmul.f32 %v210, 2.0
        %v274 = vmul.f32 %v211, 2.0
        %338 = vrot.lane.b32.xlu0 %v212, 1
        %v339 = vpop.permute.xlu0 %338
        %340 = vrot.lane.b32.xlu0 %v213, 1
        %v341 = vpop.permute.xlu0 %340
        %342 = vrot.lane.b32.xlu0 %v214, 1
        %v343 = vpop.permute.xlu0 %342
        %344 = vrot.lane.b32.xlu0 %v215, 1
        %v345 = vpop.permute.xlu0 %344
        %346 = vrot.lane.b32.xlu0 %v216, 1
        %v347 = vpop.permute.xlu0 %346
        %348 = vrot.lane.b32.xlu0 %v217, 1
        %v349 = vpop.permute.xlu0 %348
        %350 = vrot.lane.b32.xlu0 %v218, 1
        %v351 = vpop.permute.xlu0 %350
        %352 = vrot.lane.b32.xlu0 %v219, 1
        %v353 = vpop.permute.xlu0 %352
        %354 = vrot.lane.b32.xlu0 %v220, 1
        %v355 = vpop.permute.xlu0 %354
        %356 = vrot.lane.b32.xlu0 %v221, 1
        %v357 = vpop.permute.xlu0 %356
        %358 = vrot.lane.b32.xlu0 %v222, 1
        %v359 = vpop.permute.xlu0 %358
        %360 = vrot.lane.b32.xlu0 %v223, 1
        %v361 = vpop.permute.xlu0 %360
        %362 = vrot.lane.b32.xlu0 %v224, 1
        %v363 = vpop.permute.xlu0 %362
        %364 = vrot.lane.b32.xlu0 %v225, 1
        %v365 = vpop.permute.xlu0 %364
        %366 = vrot.lane.b32.xlu0 %v226, 1
        %v367 = vpop.permute.xlu0 %366
        %368 = vrot.lane.b32.xlu0 %v227, 1
        %v369 = vpop.permute.xlu0 %368
        %370 = vrot.lane.b32.xlu0 %v228, 1
        %v371 = vpop.permute.xlu0 %370
        %372 = vrot.lane.b32.xlu0 %v229, 1
        %v373 = vpop.permute.xlu0 %372
        %374 = vrot.lane.b32.xlu0 %v230, 1
        %v375 = vpop.permute.xlu0 %374
        %376 = vrot.lane.b32.xlu0 %v231, 1
        %v377 = vpop.permute.xlu0 %376
        %378 = vrot.lane.b32.xlu0 %v232, 1
        %v379 = vpop.permute.xlu0 %378
        %380 = vrot.lane.b32.xlu0 %v233, 1
        %v381 = vpop.permute.xlu0 %380
        %382 = vrot.lane.b32.xlu0 %v234, 1
        %v383 = vpop.permute.xlu0 %382
        %384 = vrot.lane.b32.xlu0 %v235, 1
        %v385 = vpop.permute.xlu0 %384
        %386 = vrot.lane.b32.xlu0 %v236, 1
        %v387 = vpop.permute.xlu0 %386
        %388 = vrot.lane.b32.xlu0 %v237, 1
        %v389 = vpop.permute.xlu0 %388
        %390 = vrot.lane.b32.xlu0 %v238, 1
        %v391 = vpop.permute.xlu0 %390
        %392 = vrot.lane.b32.xlu0 %v239, 1
        %v393 = vpop.permute.xlu0 %392
        %394 = vrot.lane.b32.xlu0 %v240, 1
        %v395 = vpop.permute.xlu0 %394
        %396 = vrot.lane.b32.xlu0 %v241, 1
        %v397 = vpop.permute.xlu0 %396
        %398 = vrot.lane.b32.xlu0 %v242, 1
        %v399 = vpop.permute.xlu0 %398
        %400 = vrot.lane.b32.xlu0 %v243, 1
        %v401 = vpop.permute.xlu0 %400
        %402 = vrot.lane.b32.xlu0 %v244, 1
        %v403 = vpop.permute.xlu0 %402
        %404 = vrot.lane.b32.xlu0 %v245, 1
        %v405 = vpop.permute.xlu0 %404
        %406 = vrot.lane.b32.xlu0 %v246, 1
        %v407 = vpop.permute.xlu0 %406
        %408 = vrot.lane.b32.xlu0 %v247, 1
        %v409 = vpop.permute.xlu0 %408
        %410 = vrot.lane.b32.xlu0 %v248, 1
        %v411 = vpop.permute.xlu0 %410
        %412 = vrot.lane.b32.xlu0 %v249, 1
        %v413 = vpop.permute.xlu0 %412
        %414 = vrot.lane.b32.xlu0 %v250, 1
        %v415 = vpop.permute.xlu0 %414
        %416 = vrot.lane.b32.xlu0 %v251, 1
        %v417 = vpop.permute.xlu0 %416
        %418 = vrot.lane.b32.xlu0 %v252, 1
        %v419 = vpop.permute.xlu0 %418
        %420 = vrot.lane.b32.xlu0 %v253, 1
        %v421 = vpop.permute.xlu0 %420
        %422 = vrot.lane.b32.xlu0 %v254, 1
        %v423 = vpop.permute.xlu0 %422
        %424 = vrot.lane.b32.xlu0 %v255, 1
        %v425 = vpop.permute.xlu0 %424
        %426 = vrot.lane.b32.xlu0 %v256, 1
        %v427 = vpop.permute.xlu0 %426
        %428 = vrot.lane.b32.xlu0 %v257, 1
        %v429 = vpop.permute.xlu0 %428
        %430 = vrot.lane.b32.xlu0 %v258, 1
        %v431 = vpop.permute.xlu0 %430
        %432 = vrot.lane.b32.xlu0 %v259, 1
        %v433 = vpop.permute.xlu0 %432
        %434 = vrot.lane.b32.xlu0 %v260, 1
        %v435 = vpop.permute.xlu0 %434
        %436 = vrot.lane.b32.xlu0 %v261, 1
        %v437 = vpop.permute.xlu0 %436
        %438 = vrot.lane.b32.xlu0 %v262, 1
        %v439 = vpop.permute.xlu0 %438
        %440 = vrot.lane.b32.xlu0 %v263, 1
        %v441 = vpop.permute.xlu0 %440
        %442 = vrot.lane.b32.xlu0 %v264, 1
        %v443 = vpop.permute.xlu0 %442
        %444 = vrot.lane.b32.xlu0 %v265, 1
        %v445 = vpop.permute.xlu0 %444
        %446 = vrot.lane.b32.xlu0 %v266, 1
        %v447 = vpop.permute.xlu0 %446
        %448 = vrot.lane.b32.xlu0 %v267, 1
        %v449 = vpop.permute.xlu0 %448
        %450 = vrot.lane.b32.xlu0 %v268, 1
        %v451 = vpop.permute.xlu0 %450
        %452 = vrot.lane.b32.xlu0 %v269, 1
        %v453 = vpop.permute.xlu0 %452
        %454 = vrot.lane.b32.xlu0 %v270, 1
        %v455 = vpop.permute.xlu0 %454
        %456 = vrot.lane.b32.xlu0 %v271, 1
        %v457 = vpop.permute.xlu0 %456
        %458 = vrot.lane.b32.xlu0 %v272, 1
        %v459 = vpop.permute.xlu0 %458
        %460 = vrot.lane.b32.xlu0 %v273, 1
        %v461 = vpop.permute.xlu0 %460
        %462 = vrot.lane.b32.xlu0 %v274, 1
        %v463 = vpop.permute.xlu0 %462
        %vm464 = vcmask 7168
        %v465 = vsel %vm464, %v339, %v341
        %v466 = vsel %vm464, %v341, %v343
        %v467 = vsel %vm464, %v345, %v347
        %v468 = vsel %vm464, %v347, %v349
        %v469 = vsel %vm464, %v351, %v353
        %v470 = vsel %vm464, %v353, %v355
        %v471 = vsel %vm464, %v357, %v359
        %v472 = vsel %vm464, %v359, %v361
        %v473 = vsel %vm464, %v363, %v365
        %v474 = vsel %vm464, %v365, %v367
        %v475 = vsel %vm464, %v369, %v371
        %v476 = vsel %vm464, %v371, %v373
        %v477 = vsel %vm464, %v375, %v377
        %v478 = vsel %vm464, %v377, %v379
        %v479 = vsel %vm464, %v381, %v383
        %v480 = vsel %vm464, %v383, %v385
        %v481 = vsel %vm464, %v387, %v389
        %v482 = vsel %vm464, %v389, %v391
        %v483 = vsel %vm464, %v393, %v395
        %v484 = vsel %vm464, %v395, %v397
        %v485 = vsel %vm464, %v399, %v401
        %v486 = vsel %vm464, %v401, %v403
        %v487 = vsel %vm464, %v405, %v407
        %v488 = vsel %vm464, %v407, %v409
        %v489 = vsel %vm464, %v411, %v413
        %v490 = vsel %vm464, %v413, %v415
        %v491 = vsel %vm464, %v417, %v419
        %v492 = vsel %vm464, %v419, %v421
        %v493 = vsel %vm464, %v423, %v425
        %v494 = vsel %vm464, %v425, %v427
        %v495 = vsel %vm464, %v429, %v431
        %v496 = vsel %vm464, %v431, %v433
        %v497 = vsel %vm464, %v435, %v437
        %v498 = vsel %vm464, %v437, %v439
        %v499 = vsel %vm464, %v441, %v443
        %v500 = vsel %vm464, %v443, %v445
        %v501 = vsel %vm464, %v447, %v449
        %v502 = vsel %vm464, %v449, %v451
        %v503 = vsel %vm464, %v453, %v455
        %v504 = vsel %vm464, %v455, %v457
        %v505 = vsel %vm464, %v459, %v461
        %v506 = vsel %vm464, %v461, %v463
        %v570 = vsub.f32 %v149, %v339
        %v571 = vsub.f32 %v150, %v465
        %v572 = vsub.f32 %v151, %v466
        %v573 = vsub.f32 %v152, %v345
        %v574 = vsub.f32 %v153, %v467
        %v575 = vsub.f32 %v154, %v468
        %v576 = vsub.f32 %v155, %v351
        %v577 = vsub.f32 %v156, %v469
        %v578 = vsub.f32 %v157, %v470
        %v579 = vsub.f32 %v158, %v357
        %v580 = vsub.f32 %v159, %v471
        %v581 = vsub.f32 %v160, %v472
        %v582 = vsub.f32 %v161, %v363
        %v583 = vsub.f32 %v162, %v473
        %v584 = vsub.f32 %v163, %v474
        %v585 = vsub.f32 %v164, %v369
        %v586 = vsub.f32 %v165, %v475
        %v587 = vsub.f32 %v166, %v476
        %v588 = vsub.f32 %v167, %v375
        %v589 = vsub.f32 %v168, %v477
        %v590 = vsub.f32 %v169, %v478
        %v591 = vsub.f32 %v170, %v381
        %v592 = vsub.f32 %v171, %v479
        %v593 = vsub.f32 %v172, %v480
        %v594 = vsub.f32 %v173, %v387
        %v595 = vsub.f32 %v174, %v481
        %v596 = vsub.f32 %v175, %v482
        %v597 = vsub.f32 %v176, %v393
        %v598 = vsub.f32 %v177, %v483
        %v599 = vsub.f32 %v178, %v484
        %v600 = vsub.f32 %v179, %v399
        %v601 = vsub.f32 %v180, %v485
        %v602 = vsub.f32 %v181, %v486
        %v603 = vsub.f32 %v182, %v405
        %v604 = vsub.f32 %v183, %v487
        %v605 = vsub.f32 %v184, %v488
        %v606 = vsub.f32 %v185, %v411
        %v607 = vsub.f32 %v186, %v489
        %v608 = vsub.f32 %v187, %v490
        %v609 = vsub.f32 %v188, %v417
        %v610 = vsub.f32 %v189, %v491
        %v611 = vsub.f32 %v190, %v492
        %v612 = vsub.f32 %v191, %v423
        %v613 = vsub.f32 %v192, %v493
        %v614 = vsub.f32 %v193, %v494
        %v615 = vsub.f32 %v194, %v429
        %v616 = vsub.f32 %v195, %v495
        %v617 = vsub.f32 %v196, %v496
        %v618 = vsub.f32 %v197, %v435
        %v619 = vsub.f32 %v198, %v497
        %v620 = vsub.f32 %v199, %v498
        %v621 = vsub.f32 %v200, %v441
        %v622 = vsub.f32 %v201, %v499
        %v623 = vsub.f32 %v202, %v500
        %v624 = vsub.f32 %v203, %v447
        %v625 = vsub.f32 %v204, %v501
        %v626 = vsub.f32 %v205, %v502
        %v627 = vsub.f32 %v206, %v453
        %v628 = vsub.f32 %v207, %v503
        %v629 = vsub.f32 %v208, %v504
        %v630 = vsub.f32 %v209, %v459
        %v631 = vsub.f32 %v210, %v505
        %v632 = vsub.f32 %v211, %v506
        %696 = vrot.lane.b32.xlu0 %v149, 2
        %v697 = vpop.permute.xlu0 %696
        %698 = vrot.lane.b32.xlu0 %v150, 2
        %v699 = vpop.permute.xlu0 %698
        %700 = vrot.lane.b32.xlu0 %v151, 2
        %v701 = vpop.permute.xlu0 %700
        %702 = vrot.lane.b32.xlu0 %v152, 2
        %v703 = vpop.permute.xlu0 %702
        %704 = vrot.lane.b32.xlu0 %v153, 2
        %v705 = vpop.permute.xlu0 %704
        %706 = vrot.lane.b32.xlu0 %v154, 2
        %v707 = vpop.permute.xlu0 %706
        %708 = vrot.lane.b32.xlu0 %v155, 2
        %v709 = vpop.permute.xlu0 %708
        %710 = vrot.lane.b32.xlu0 %v156, 2
        %v711 = vpop.permute.xlu0 %710
        %712 = vrot.lane.b32.xlu0 %v157, 2
        %v713 = vpop.permute.xlu0 %712
        %714 = vrot.lane.b32.xlu0 %v158, 2
        %v715 = vpop.permute.xlu0 %714
        %716 = vrot.lane.b32.xlu0 %v159, 2
        %v717 = vpop.permute.xlu0 %716
        %718 = vrot.lane.b32.xlu0 %v160, 2
        %v719 = vpop.permute.xlu0 %718
        %720 = vrot.lane.b32.xlu0 %v161, 2
        %v721 = vpop.permute.xlu0 %720
        %722 = vrot.lane.b32.xlu0 %v162, 2
        %v723 = vpop.permute.xlu0 %722
        %724 = vrot.lane.b32.xlu0 %v163, 2
        %v725 = vpop.permute.xlu0 %724
        %726 = vrot.lane.b32.xlu0 %v164, 2
        %v727 = vpop.permute.xlu0 %726
        %728 = vrot.lane.b32.xlu0 %v165, 2
        %v729 = vpop.permute.xlu0 %728
        %730 = vrot.lane.b32.xlu0 %v166, 2
        %v731 = vpop.permute.xlu0 %730
        %732 = vrot.lane.b32.xlu0 %v167, 2
        %v733 = vpop.permute.xlu0 %732
        %734 = vrot.lane.b32.xlu0 %v168, 2
        %v735 = vpop.permute.xlu0 %734
        %736 = vrot.lane.b32.xlu0 %v169, 2
        %v737 = vpop.permute.xlu0 %736
        %738 = vrot.lane.b32.xlu0 %v170, 2
        %v739 = vpop.permute.xlu0 %738
        %740 = vrot.lane.b32.xlu0 %v171, 2
        %v741 = vpop.permute.xlu0 %740
        %742 = vrot.lane.b32.xlu0 %v172, 2
        %v743 = vpop.permute.xlu0 %742
        %744 = vrot.lane.b32.xlu0 %v173, 2
        %v745 = vpop.permute.xlu0 %744
        %746 = vrot.lane.b32.xlu0 %v174, 2
        %v747 = vpop.permute.xlu0 %746
        %748 = vrot.lane.b32.xlu0 %v175, 2
        %v749 = vpop.permute.xlu0 %748
        %750 = vrot.lane.b32.xlu0 %v176, 2
        %v751 = vpop.permute.xlu0 %750
        %752 = vrot.lane.b32.xlu0 %v177, 2
        %v753 = vpop.permute.xlu0 %752
        %754 = vrot.lane.b32.xlu0 %v178, 2
        %v755 = vpop.permute.xlu0 %754
        %756 = vrot.lane.b32.xlu0 %v179, 2
        %v757 = vpop.permute.xlu0 %756
        %758 = vrot.lane.b32.xlu0 %v180, 2
        %v759 = vpop.permute.xlu0 %758
        %760 = vrot.lane.b32.xlu0 %v181, 2
        %v761 = vpop.permute.xlu0 %760
        %762 = vrot.lane.b32.xlu0 %v182, 2
        %v763 = vpop.permute.xlu0 %762
        %764 = vrot.lane.b32.xlu0 %v183, 2
        %v765 = vpop.permute.xlu0 %764
        %766 = vrot.lane.b32.xlu0 %v184, 2
        %v767 = vpop.permute.xlu0 %766
        %768 = vrot.lane.b32.xlu0 %v185, 2
        %v769 = vpop.permute.xlu0 %768
        %770 = vrot.lane.b32.xlu0 %v186, 2
        %v771 = vpop.permute.xlu0 %770
        %772 = vrot.lane.b32.xlu0 %v187, 2
        %v773 = vpop.permute.xlu0 %772
        %774 = vrot.lane.b32.xlu0 %v188, 2
        %v775 = vpop.permute.xlu0 %774
        %776 = vrot.lane.b32.xlu0 %v189, 2
        %v777 = vpop.permute.xlu0 %776
        %778 = vrot.lane.b32.xlu0 %v190, 2
        %v779 = vpop.permute.xlu0 %778
        %780 = vrot.lane.b32.xlu0 %v191, 2
        %v781 = vpop.permute.xlu0 %780
        %782 = vrot.lane.b32.xlu0 %v192, 2
        %v783 = vpop.permute.xlu0 %782
        %784 = vrot.lane.b32.xlu0 %v193, 2
        %v785 = vpop.permute.xlu0 %784
        %786 = vrot.lane.b32.xlu0 %v194, 2
        %v787 = vpop.permute.xlu0 %786
        %788 = vrot.lane.b32.xlu0 %v195, 2
        %v789 = vpop.permute.xlu0 %788
        %790 = vrot.lane.b32.xlu0 %v196, 2
        %v791 = vpop.permute.xlu0 %790
        %792 = vrot.lane.b32.xlu0 %v197, 2
        %v793 = vpop.permute.xlu0 %792
        %794 = vrot.lane.b32.xlu0 %v198, 2
        %v795 = vpop.permute.xlu0 %794
        %796 = vrot.lane.b32.xlu0 %v199, 2
        %v797 = vpop.permute.xlu0 %796
        %798 = vrot.lane.b32.xlu0 %v200, 2
        %v799 = vpop.permute.xlu0 %798
        %800 = vrot.lane.b32.xlu0 %v201, 2
        %v801 = vpop.permute.xlu0 %800
        %802 = vrot.lane.b32.xlu0 %v202, 2
        %v803 = vpop.permute.xlu0 %802
        %804 = vrot.lane.b32.xlu0 %v203, 2
        %v805 = vpop.permute.xlu0 %804
        %806 = vrot.lane.b32.xlu0 %v204, 2
        %v807 = vpop.permute.xlu0 %806
        %808 = vrot.lane.b32.xlu0 %v205, 2
        %v809 = vpop.permute.xlu0 %808
        %810 = vrot.lane.b32.xlu0 %v206, 2
        %v811 = vpop.permute.xlu0 %810
        %812 = vrot.lane.b32.xlu0 %v207, 2
        %v813 = vpop.permute.xlu0 %812
        %814 = vrot.lane.b32.xlu0 %v208, 2
        %v815 = vpop.permute.xlu0 %814
        %816 = vrot.lane.b32.xlu0 %v209, 2
        %v817 = vpop.permute.xlu0 %816
        %818 = vrot.lane.b32.xlu0 %v210, 2
        %v819 = vpop.permute.xlu0 %818
        %820 = vrot.lane.b32.xlu0 %v211, 2
        %v821 = vpop.permute.xlu0 %820
        %vm822 = vcmask 15360
        %v823 = vsel %vm822, %v697, %v699
        %v824 = vsel %vm822, %v699, %v701
        %v825 = vsel %vm822, %v703, %v705
        %v826 = vsel %vm822, %v705, %v707
        %v827 = vsel %vm822, %v709, %v711
        %v828 = vsel %vm822, %v711, %v713
        %v829 = vsel %vm822, %v715, %v717
        %v830 = vsel %vm822, %v717, %v719
        %v831 = vsel %vm822, %v721, %v723
        %v832 = vsel %vm822, %v723, %v725
        %v833 = vsel %vm822, %v727, %v729
        %v834 = vsel %vm822, %v729, %v731
        %v835 = vsel %vm822, %v733, %v735
        %v836 = vsel %vm822, %v735, %v737
        %v837 = vsel %vm822, %v739, %v741
        %v838 = vsel %vm822, %v741, %v743
        %v839 = vsel %vm822, %v745, %v747
        %v840 = vsel %vm822, %v747, %v749
        %v841 = vsel %vm822, %v751, %v753
        %v842 = vsel %vm822, %v753, %v755
        %v843 = vsel %vm822, %v757, %v759
        %v844 = vsel %vm822, %v759, %v761
        %v845 = vsel %vm822, %v763, %v765
        %v846 = vsel %vm822, %v765, %v767
        %v847 = vsel %vm822, %v769, %v771
        %v848 = vsel %vm822, %v771, %v773
        %v849 = vsel %vm822, %v775, %v777
        %v850 = vsel %vm822, %v777, %v779
        %v851 = vsel %vm822, %v781, %v783
        %v852 = vsel %vm822, %v783, %v785
        %v853 = vsel %vm822, %v787, %v789
        %v854 = vsel %vm822, %v789, %v791
        %v855 = vsel %vm822, %v793, %v795
        %v856 = vsel %vm822, %v795, %v797
        %v857 = vsel %vm822, %v799, %v801
        %v858 = vsel %vm822, %v801, %v803
        %v859 = vsel %vm822, %v805, %v807
        %v860 = vsel %vm822, %v807, %v809
        %v861 = vsel %vm822, %v811, %v813
        %v862 = vsel %vm822, %v813, %v815
        %v863 = vsel %vm822, %v817, %v819
        %v864 = vsel %vm822, %v819, %v821
        %v928 = vadd.f32 %v570, %v697
        %v929 = vadd.f32 %v571, %v823
        %v930 = vadd.f32 %v572, %v824
        %v931 = vadd.f32 %v573, %v703
        %v932 = vadd.f32 %v574, %v825
        %v933 = vadd.f32 %v575, %v826
        %v934 = vadd.f32 %v576, %v709
        %v935 = vadd.f32 %v577, %v827
        %v936 = vadd.f32 %v578, %v828
        %v937 = vadd.f32 %v579, %v715
        %v938 = vadd.f32 %v580, %v829
        %v939 = vadd.f32 %v581, %v830
        %v940 = vadd.f32 %v582, %v721
        %v941 = vadd.f32 %v583, %v831
        %v942 = vadd.f32 %v584, %v832
        %v943 = vadd.f32 %v585, %v727
        %v944 = vadd.f32 %v586, %v833
        %v945 = vadd.f32 %v587, %v834
        %v946 = vadd.f32 %v588, %v733
        %v947 = vadd.f32 %v589, %v835
        %v948 = vadd.f32 %v590, %v836
        %v949 = vadd.f32 %v591, %v739
        %v950 = vadd.f32 %v592, %v837
        %v951 = vadd.f32 %v593, %v838
        %v952 = vadd.f32 %v594, %v745
        %v953 = vadd.f32 %v595, %v839
        %v954 = vadd.f32 %v596, %v840
        %v955 = vadd.f32 %v597, %v751
        %v956 = vadd.f32 %v598, %v841
        %v957 = vadd.f32 %v599, %v842
        %v958 = vadd.f32 %v600, %v757
        %v959 = vadd.f32 %v601, %v843
        %v960 = vadd.f32 %v602, %v844
        %v961 = vadd.f32 %v603, %v763
        %v962 = vadd.f32 %v604, %v845
        %v963 = vadd.f32 %v605, %v846
        %v964 = vadd.f32 %v606, %v769
        %v965 = vadd.f32 %v607, %v847
        %v966 = vadd.f32 %v608, %v848
        %v967 = vadd.f32 %v609, %v775
        %v968 = vadd.f32 %v610, %v849
        %v969 = vadd.f32 %v611, %v850
        %v970 = vadd.f32 %v612, %v781
        %v971 = vadd.f32 %v613, %v851
        %v972 = vadd.f32 %v614, %v852
        %v973 = vadd.f32 %v615, %v787
        %v974 = vadd.f32 %v616, %v853
        %v975 = vadd.f32 %v617, %v854
        %v976 = vadd.f32 %v618, %v793
        %v977 = vadd.f32 %v619, %v855
        %v978 = vadd.f32 %v620, %v856
        %v979 = vadd.f32 %v621, %v799
        %v980 = vadd.f32 %v622, %v857
        %v981 = vadd.f32 %v623, %v858
        %v982 = vadd.f32 %v624, %v805
        %v983 = vadd.f32 %v625, %v859
        %v984 = vadd.f32 %v626, %v860
        %v985 = vadd.f32 %v627, %v811
        %v986 = vadd.f32 %v628, %v861
        %v987 = vadd.f32 %v629, %v862
        %v988 = vadd.f32 %v630, %v817
        %v989 = vadd.f32 %v631, %v863
        %v990 = vadd.f32 %v632, %v864
        %v991 = vmul.f32 %v928, %v928
        %v992 = vmul.f32 %v929, %v929
        %v993 = vmul.f32 %v930, %v930
        %v994 = vmul.f32 %v931, %v931
        %v995 = vmul.f32 %v932, %v932
        %v996 = vmul.f32 %v933, %v933
        %v997 = vmul.f32 %v934, %v934
        %v998 = vmul.f32 %v935, %v935
        %v999 = vmul.f32 %v936, %v936
        %v1000 = vmul.f32 %v937, %v937
        %v1001 = vmul.f32 %v938, %v938
        %v1002 = vmul.f32 %v939, %v939
        %v1003 = vmul.f32 %v940, %v940
        %v1004 = vmul.f32 %v941, %v941
        %v1005 = vmul.f32 %v942, %v942
        %v1006 = vmul.f32 %v943, %v943
        %v1007 = vmul.f32 %v944, %v944
        %v1008 = vmul.f32 %v945, %v945
        %v1009 = vmul.f32 %v946, %v946
        %v1010 = vmul.f32 %v947, %v947
        %v1011 = vmul.f32 %v948, %v948
        %v1012 = vmul.f32 %v949, %v949
        %v1013 = vmul.f32 %v950, %v950
        %v1014 = vmul.f32 %v951, %v951
        %v1015 = vmul.f32 %v952, %v952
        %v1016 = vmul.f32 %v953, %v953
        %v1017 = vmul.f32 %v954, %v954
        %v1018 = vmul.f32 %v955, %v955
        %v1019 = vmul.f32 %v956, %v956
        %v1020 = vmul.f32 %v957, %v957
        %v1021 = vmul.f32 %v958, %v958
        %v1022 = vmul.f32 %v959, %v959
        %v1023 = vmul.f32 %v960, %v960
        %v1024 = vmul.f32 %v961, %v961
        %v1025 = vmul.f32 %v962, %v962
        %v1026 = vmul.f32 %v963, %v963
        %v1027 = vmul.f32 %v964, %v964
        %v1028 = vmul.f32 %v965, %v965
        %v1029 = vmul.f32 %v966, %v966
        %v1030 = vmul.f32 %v967, %v967
        %v1031 = vmul.f32 %v968, %v968
        %v1032 = vmul.f32 %v969, %v969
        %v1033 = vmul.f32 %v970, %v970
        %v1034 = vmul.f32 %v971, %v971
        %v1035 = vmul.f32 %v972, %v972
        %v1036 = vmul.f32 %v973, %v973
        %v1037 = vmul.f32 %v974, %v974
        %v1038 = vmul.f32 %v975, %v975
        %v1039 = vmul.f32 %v976, %v976
        %v1040 = vmul.f32 %v977, %v977
        %v1041 = vmul.f32 %v978, %v978
        %v1042 = vmul.f32 %v979, %v979
        %v1043 = vmul.f32 %v980, %v980
        %v1044 = vmul.f32 %v981, %v981
        %v1045 = vmul.f32 %v982, %v982
        %v1046 = vmul.f32 %v983, %v983
        %v1047 = vmul.f32 %v984, %v984
        %v1048 = vmul.f32 %v985, %v985
        %v1049 = vmul.f32 %v986, %v986
        %v1050 = vmul.f32 %v987, %v987
        %v1051 = vmul.f32 %v988, %v988
        %v1052 = vmul.f32 %v989, %v989
        %v1053 = vmul.f32 %v990, %v990
        %vm1054 = vcmask 1047568
        %v1055 = vsel %vm1054, %v991, 0.0
        %v1056 = vsel %vm1054, %v994, 0.0
        %v1057 = vadd.f32 %v1055, %v1056
        %v1058 = vsel %vm1054, %v997, 0.0
        %v1059 = vadd.f32 %v1057, %v1058
        %v1060 = vsel %vm1054, %v1000, 0.0
        %v1061 = vadd.f32 %v1059, %v1060
        %v1062 = vsel %vm1054, %v1003, 0.0
        %v1063 = vadd.f32 %v1061, %v1062
        %v1064 = vsel %vm1054, %v1006, 0.0
        %v1065 = vadd.f32 %v1063, %v1064
        %v1066 = vsel %vm1054, %v1009, 0.0
        %v1067 = vadd.f32 %v1065, %v1066
        %v1068 = vsel %vm1054, %v1012, 0.0
        %v1069 = vadd.f32 %v1067, %v1068
        %v1070 = vsel %vm1054, %v1015, 0.0
        %v1071 = vadd.f32 %v1069, %v1070
        %v1072 = vsel %vm1054, %v1018, 0.0
        %v1073 = vadd.f32 %v1071, %v1072
        %v1074 = vsel %vm1054, %v1021, 0.0
        %v1075 = vadd.f32 %v1073, %v1074
        %v1076 = vsel %vm1054, %v1024, 0.0
        %v1077 = vadd.f32 %v1075, %v1076
        %v1078 = vsel %vm1054, %v1027, 0.0
        %v1079 = vadd.f32 %v1077, %v1078
        %v1080 = vsel %vm1054, %v1030, 0.0
        %v1081 = vadd.f32 %v1079, %v1080
        %v1082 = vsel %vm1054, %v1033, 0.0
        %v1083 = vadd.f32 %v1081, %v1082
        %v1084 = vsel %vm1054, %v1036, 0.0
        %v1085 = vadd.f32 %v1083, %v1084
        %v1086 = vsel %vm1054, %v1039, 0.0
        %v1087 = vadd.f32 %v1085, %v1086
        %v1088 = vsel %vm1054, %v1042, 0.0
        %v1089 = vadd.f32 %v1087, %v1088
        %v1090 = vsel %vm1054, %v1045, 0.0
        %v1091 = vadd.f32 %v1089, %v1090
        %v1092 = vsel %vm1054, %v1048, 0.0
        %v1093 = vadd.f32 %v1091, %v1092
        %v1094 = vsel %vm1054, %v1051, 0.0
        %v1095 = vadd.f32 %v1093, %v1094
        %v1096 = vrot.slane %v1095, 4
        %v1097 = vadd.f32 %v1095, %v1096
        %v1098 = vrot.slane %v1097, 2
        %v1099 = vadd.f32 %v1097, %v1098
        %v1100 = vrot.slane %v1099, 1
        %v1101 = vadd.f32 %v1099, %v1100
        %v1102 = vadd.f32 %v992, %v995
        %v1103 = vadd.f32 %v1102, %v998
        %v1104 = vadd.f32 %v1103, %v1001
        %v1105 = vadd.f32 %v1104, %v1004
        %v1106 = vadd.f32 %v1105, %v1007
        %v1107 = vadd.f32 %v1106, %v1010
        %v1108 = vadd.f32 %v1107, %v1013
        %v1109 = vadd.f32 %v1108, %v1016
        %v1110 = vadd.f32 %v1109, %v1019
        %v1111 = vadd.f32 %v1110, %v1022
        %v1112 = vadd.f32 %v1111, %v1025
        %v1113 = vadd.f32 %v1112, %v1028
        %v1114 = vadd.f32 %v1113, %v1031
        %v1115 = vadd.f32 %v1114, %v1034
        %v1116 = vadd.f32 %v1115, %v1037
        %v1117 = vadd.f32 %v1116, %v1040
        %v1118 = vadd.f32 %v1117, %v1043
        %v1119 = vadd.f32 %v1118, %v1046
        %v1120 = vadd.f32 %v1119, %v1049
        %v1121 = vadd.f32 %v1120, %v1052
        %v1122 = vrot.slane %v1121, 4
        %v1123 = vadd.f32 %v1121, %v1122
        %v1124 = vrot.slane %v1123, 2
        %v1125 = vadd.f32 %v1123, %v1124
        %v1126 = vrot.slane %v1125, 1
        %v1127 = vadd.f32 %v1125, %v1126
        %v1128 = vadd.f32 %v993, %v996
        %v1129 = vadd.f32 %v1128, %v999
        %v1130 = vadd.f32 %v1129, %v1002
        %v1131 = vadd.f32 %v1130, %v1005
        %v1132 = vadd.f32 %v1131, %v1008
        %v1133 = vadd.f32 %v1132, %v1011
        %v1134 = vadd.f32 %v1133, %v1014
        %v1135 = vadd.f32 %v1134, %v1017
        %v1136 = vadd.f32 %v1135, %v1020
        %v1137 = vadd.f32 %v1136, %v1023
        %v1138 = vadd.f32 %v1137, %v1026
        %v1139 = vadd.f32 %v1138, %v1029
        %v1140 = vadd.f32 %v1139, %v1032
        %v1141 = vadd.f32 %v1140, %v1035
        %v1142 = vadd.f32 %v1141, %v1038
        %v1143 = vadd.f32 %v1142, %v1041
        %v1144 = vadd.f32 %v1143, %v1044
        %v1145 = vadd.f32 %v1144, %v1047
        %v1146 = vadd.f32 %v1145, %v1050
        %v1147 = vadd.f32 %v1146, %v1053
        %v1148 = vrot.slane %v1147, 4
        %v1149 = vadd.f32 %v1147, %v1148
        %v1150 = vrot.slane %v1149, 2
        %v1151 = vadd.f32 %v1149, %v1150
        %v1152 = vrot.slane %v1151, 1
        %v1153 = vadd.f32 %v1151, %v1152
        %v1157 = vcombine.low %v1101, %v1127
        %v1159 = vunpack.c.l.s4 1966171168
        %v1160 = vunpack.c.0.s8 %v1159
        %v1161 = vlaneseq
        %v1162 = vshrl.u32 %v1161, 7
        %v1163 = vsub.s32 %v1160, %v1162
        %v1164 = vrot.slane %v1157, %v1163
        %v1166 = vunpack.c.l.s4 1966171168
        %v1167 = vunpack.c.0.s8 %v1166
        %v1168 = vlaneseq
        %v1169 = vshrl.u32 %v1168, 7
        %v1170 = vsub.s32 %v1167, %v1169
        %v1171 = vrot.slane %v1153, %v1170
        %v1172 = vcombine.low %v1164, %v1171
        %v1174 = vunpack.c.l.s4 1966171168
        %v1175 = vunpack.c.0.s8 %v1174
        %v1176 = vlaneseq
        %v1177 = vshrl.u32 %v1176, 7
        %v1178 = vsub.s32 %v1175, %v1177
        %v1179 = vrot.slane %v1172, %v1178
        %1180 = vrot.lane.b32.xlu0 %v1179, 126
        %v1181 = vpop.permute.xlu0 %1180
        %v1182 = vrot.slane %v1181, 1
        %vm1183 = vcmask 1031168
        %v1184 = vsel %vm1183, %v1181, %v1182
        %v1186 = vlaneseq
        %vm1187 = vcmp.ge.s32.totalorder %v1186, 0
        %vm1188 = vcmp.lt.s32.totalorder %v1186, 382
        %vm1189 = vmand %vm1187, %vm1188
        %1190 = vst.msk [vmem:[%s142] sm:$0x7] %vm1189, %v1184
        %s1191 = sand.u32 %s52, 1
        %s1192 = scalar_lea.sflag [#allocation4], %s1191
        %s1193 = sand.u32 %s52, 1
        %s1194 = smul.addr %s1193, 3
        %s1195 = scalar_lea.vmem [#allocation5], %s1194
        // Predicated region
        $region29: #{tpu_custom_call.1} parent=23 // pred_check
          %p1196 = pneg %p62
        $region30: #{tpu_custom_call.1} parent=23 // pred_check_branch
          %1198 = sbr.rel (%p1196) target = $region32
        $region31: #{tpu_custom_call.1} parent=23 // pred_region
          %s1200 = ssub.s32 48, 48
          %1201 = vsyncadd %s1192, %s1200
          %s1202 = smul.addr %s18, 3
          %s1203 = smul.addr %s1202, 16
          %s1204 = scalar_lea.hbm %s1, %s1203
          %s1206 = sshll.u32 %s1195, 4
          %s1207 = int_to_ptr.vmem [resolvable:$true] %s1206
          %1209 = dma.vmem_to_hbm [thread:$0]  %s1207, 48, %s1204, %s1192
        $region32: #{tpu_custom_call.1} parent=23 // pred_fallthru
          _
      $region24: #{tpu_custom_call.1} parent=5 // pred_fallthru
        _
      %p1210 = scmp.le.s32.totalorder 2, %s13
      // Predicated region
      $region33: #{tpu_custom_call.1} parent=5 // pred_check
        %p1211 = pneg %p1210
      $region34: #{tpu_custom_call.1} parent=5 // pred_check_branch
        %1213 = sbr.rel (%p1211) target = $region36
      $region35: #{tpu_custom_call.1} parent=5 // pred_region
        %s1214 = ssub.s32 %s13, 2
        // Predicated region
        $region37: #{tpu_custom_call.1} parent=35 // pred_check
          %p1215 = pneg %p68
        $region38: #{tpu_custom_call.1} parent=35 // pred_check_branch
          %1217 = sbr.rel (%p1215) target = $region40
        $region39: #{tpu_custom_call.1} parent=35 // pred_region
          %s1218 = sand.u32 %s53, 1
          %s1219 = scalar_lea.sflag [#allocation4], %s1218
          %s1220 = sand.u32 %s53, 1
          %s1221 = smul.addr %s1220, 3
          %s1222 = scalar_lea.vmem [#allocation5], %s1221
          %1223 = dma.done %s1219, 48
        $region40: #{tpu_custom_call.1} parent=35 // pred_fallthru
          _
      $region36: #{tpu_custom_call.1} parent=5 // pred_fallthru
        _
    $region6: #{tpu_custom_call.1} parent=1 // loop_footer
      %s17 = sadd.s32 1, %s13
    $region7: #{tpu_custom_call.1} parent=1 // loop_footer_branch
      %12 = sbr.rel target = $region3
    $region8: #{tpu_custom_call.1} parent=1 // loop_exit
      _
    %1224 = vsyncpa [#allocation3], 1
    %s1225 = scalar_lea.sflag [#allocation3], 1
    %1226 = vsyncpa %s1225, 1
    %1227 = vsyncpa [#allocation4], 1
    %s1228 = scalar_lea.sflag [#allocation4], 1
    %1229 = vsyncpa %s1228, 1

</llo_original>
